<compile_context>
chip_gen: v7x
topology: tpu7x:2x2x1
jax: 0.10.0
libtpu: 0.0.40
codegen_flags: <defaults>
</compile_context>

<pallas_src>
import jax
import jax.numpy as jnp
from jax import lax
from jax.experimental import pallas as pl
from jax.experimental.pallas import tpu as pltpu

_WIDTHS = (1024, 512, 256, 128)          # lane-dense candidate last dims
_BLOCK_BYTES = 3 * 1024 * 1024           # ~3 MiB f32 per array per grid step
_VMEM_LIMIT = 32 * 1024 * 1024           # 4 arrays x 2 buffers x 3 MiB ~= 24 MiB


def _c_cardioid_kernel(re_ref, im_ref, ore_ref, oim_ref):
    re = re_ref[...]
    im = im_ref[...]
    mag2 = re * re + im * im
    inv_mag = lax.rsqrt(mag2)                       # EUP slot; +inf at zero
    # angle(0) = 0 -> cos = 1 (also avoids 0 * inf = NaN at z == 0)
    cos_t = jnp.where(mag2 > 0.0, re * inv_mag, jnp.float32(1.0))
    scale = jnp.float32(0.5) + jnp.float32(0.5) * cos_t
    ore_ref[...] = scale * re
    oim_ref[...] = scale * im


def _c_cardioid_jnp(z):
    """Pure-XLA fallback / tail path (exact reference formula)."""
    return (0.5 * (1.0 + jnp.cos(jnp.angle(z))) * z).astype(z.dtype)


def _row_tile(rows, width):
    """~3 MiB f32 blocks, multiple-of-8 row tiles, and (when possible) an even
    number of near-equal blocks so v7x's two TensorCores split the row axis."""
    if rows <= 8:
        return rows                                  # single full block
    target = max(8, (_BLOCK_BYTES // (4 * width)) // 8 * 8)
    half = max(8, pl.cdiv((rows + 1) // 2, 8) * 8)   # >= 2 blocks when rows > 8
    tile = min(target, half)
    n_blocks = pl.cdiv(rows, tile)
    if n_blocks > 1 and n_blocks % 2 == 1:
        alt = max(8, pl.cdiv(pl.cdiv(rows, n_blocks + 1), 8) * 8)
        if pl.cdiv(rows, alt) % 2 == 0:              # only take it if it helps
            tile = alt
    return tile


def c_cardioid(x: jax.Array) -> jax.Array:
    """Complex cardioid activation, matching the PyTorch CCardioid forward."""
    orig_shape = x.shape
    orig_dtype = x.dtype
    n = x.size
    if n == 0:
        return x

    if not jnp.issubdtype(orig_dtype, jnp.complexfloating):
        # Real input: angle(x) in {0, pi} -> scale in {1, 0} -> f(x) = relu(x).
        # Avoids streaming a zeros imag plane + dead imag output (mem-bound op).
        return jnp.maximum(x, 0).astype(orig_dtype)

    if orig_dtype != jnp.complex64:
        # TODO(synk): complex128 has no f64 TPU-kernel path; fused XLA formula.
        return _c_cardioid_jnp(x)

    # TODO(synk): lax.bitcast_convert_type rejects complex dtypes, so the
    # de-interleave / re-interleave passes cannot be folded into the kernel.
    x_flat = x.reshape(-1)
    width = next((w for w in _WIDTHS if n % w == 0), 128)
    main_n = (n // width) * width
    rem = n - main_n
    if main_n == 0:                                   # < 128 elements
        return _c_cardioid_jnp(x)

    main_c = x_flat if rem == 0 else x_flat[:main_n]
    rows = main_n // width
    re = jnp.real(main_c).reshape(rows, width)        # f32 plane
    im = jnp.imag(main_c).reshape(rows, width)        # f32 plane

    row_tile = _row_tile(rows, width)
    grid = (pl.cdiv(rows, row_tile),)
    block = pl.BlockSpec((row_tile, width), lambda i: (i, 0))

    out_re, out_im = pl.pallas_call(
        _c_cardioid_kernel,
        out_shape=(jax.ShapeDtypeStruct((rows, width), jnp.float32),
                   jax.ShapeDtypeStruct((rows, width), jnp.float32)),
        grid_spec=pltpu.PrefetchScalarGridSpec(
            num_scalar_prefetch=0,
            grid=grid,
            in_specs=[block, block],
            out_specs=(block, block),
        ),
        compiler_params=pltpu.CompilerParams(
            dimension_semantics=("parallel",),
            vmem_limit_bytes=_VMEM_LIMIT,
        ),
    )(re, im)

    out = lax.complex(out_re.reshape(-1), out_im.reshape(-1))
    if rem:
        out = jnp.concatenate([out, _c_cardioid_jnp(x_flat[main_n:])])
    return out.reshape(orig_shape)


def c_cardioid_reference(z: jax.Array) -> jax.Array:
    return (0.5 * (1.0 + jnp.cos(jnp.angle(z))) * z).astype(z.dtype)


if __name__ == "__main__":
    key = jax.random.PRNGKey(0)

    def rand_complex(k, shape):
        k_re, k_im = jax.random.split(k)
        return (jax.random.normal(k_re, shape, jnp.float32)
                + 1j * jax.random.normal(k_im, shape, jnp.float32)
                ).astype(jnp.complex64)

    k0, k1, k2, k3 = jax.random.split(key, 4)

    # Main case: small 4-D complex activation input.
    x = rand_complex(k0, (2, 4, 16, 16))
    out = jax.block_until_ready(c_cardioid(x))
    assert out.shape == x.shape and out.dtype == x.dtype
    assert jnp.allclose(out, c_cardioid_reference(x), atol=1e-5, rtol=1e-4)

    # Multi-block path (rows > 8 -> 2 "parallel" grid steps).
    x2 = rand_complex(k1, (64, 512))
    out2 = jax.block_until_ready(c_cardioid(x2))
    assert jnp.allclose(out2, c_cardioid_reference(x2), atol=1e-5, rtol=1e-4)

    # Ragged path (n not a multiple of 128 -> kernel prefix + jnp tail).
    x3 = rand_complex(k2, (5, 100))
    out3 = jax.block_until_ready(c_cardioid(x3))
    assert jnp.allclose(out3, c_cardioid_reference(x3), atol=1e-5, rtol=1e-4)

    # Real input -> ReLU shortcut.
    x4 = jax.random.normal(k3, (4, 8), jnp.float32)
    out4 = jax.block_until_ready(c_cardioid(x4))
    assert jnp.allclose(out4, jnp.maximum(x4, 0.0))

    print("KERNEL_OK")
</pallas_src>

<mosaic_0001>
module attributes {stable_mosaic.version = 11 : i64} {
  func.func @_c_cardioid_kernel(%arg0: i32, %arg1: memref<2x1024xf32, #tpu.memory_space<vmem>>, %arg2: memref<2x1024xf32, #tpu.memory_space<vmem>>, %arg3: memref<2x1024xf32, #tpu.memory_space<vmem>>, %arg4: memref<2x1024xf32, #tpu.memory_space<vmem>>) attributes {dimension_semantics = [#tpu.dimension_semantics<parallel>], iteration_bounds = array<i64: 1>, scalar_prefetch = 0 : i64, scratch_operands = 0 : i64, tpu.core_type = #tpu.core_type<tc>, window_params = [{transform_indices = @transform_0, window_bounds = array<i64: 2, 1024>}, {transform_indices = @transform_1, window_bounds = array<i64: 2, 1024>}, {transform_indices = @transform_2, window_bounds = array<i64: 2, 1024>}, {transform_indices = @transform_3, window_bounds = array<i64: 2, 1024>}]} {
    %c0 = arith.constant 0 : index
    %c0_0 = arith.constant 0 : index
    %0 = vector.load %arg1[%c0, %c0_0] : memref<2x1024xf32, #tpu.memory_space<vmem>>, vector<2x1024xf32>
    %c0_1 = arith.constant 0 : index
    %c0_2 = arith.constant 0 : index
    %1 = vector.load %arg2[%c0_1, %c0_2] : memref<2x1024xf32, #tpu.memory_space<vmem>>, vector<2x1024xf32>
    %2 = arith.mulf %0, %0 : vector<2x1024xf32>
    %3 = arith.mulf %1, %1 : vector<2x1024xf32>
    %4 = arith.addf %2, %3 : vector<2x1024xf32>
    %5 = math.rsqrt %4 : vector<2x1024xf32>
    %cst = arith.constant 0.000000e+00 : f32
    %6 = vector.broadcast %cst : f32 to vector<2x1024xf32>
    %7 = arith.cmpf ogt, %4, %6 : vector<2x1024xf32>
    %8 = arith.mulf %0, %5 : vector<2x1024xf32>
    %cst_3 = arith.constant 1.000000e+00 : f32
    %9 = vector.broadcast %cst_3 : f32 to vector<2x1024xf32>
    %10 = arith.select %7, %8, %9 : vector<2x1024xi1>, vector<2x1024xf32>
    %cst_4 = arith.constant 5.000000e-01 : f32
    %11 = vector.broadcast %cst_4 : f32 to vector<2x1024xf32>
    %12 = arith.mulf %11, %10 : vector<2x1024xf32>
    %cst_5 = arith.constant 5.000000e-01 : f32
    %13 = vector.broadcast %cst_5 : f32 to vector<2x1024xf32>
    %14 = arith.addf %13, %12 : vector<2x1024xf32>
    %15 = arith.mulf %14, %0 : vector<2x1024xf32>
    %c0_6 = arith.constant 0 : index
    %c0_7 = arith.constant 0 : index
    %16 = vector.load %arg3[%c0_6, %c0_7] : memref<2x1024xf32, #tpu.memory_space<vmem>>, vector<2x1024xf32>
    tpu.vector_store %arg3[%c0_6, %c0_7], %15 {strides = array<i32>} : memref<2x1024xf32, #tpu.memory_space<vmem>>, vector<2x1024xf32>,
    %17 = arith.mulf %14, %1 : vector<2x1024xf32>
    %c0_8 = arith.constant 0 : index
    %c0_9 = arith.constant 0 : index
    %18 = vector.load %arg4[%c0_8, %c0_9] : memref<2x1024xf32, #tpu.memory_space<vmem>>, vector<2x1024xf32>
    tpu.vector_store %arg4[%c0_8, %c0_9], %17 {strides = array<i32>} : memref<2x1024xf32, #tpu.memory_space<vmem>>, vector<2x1024xf32>,
    return
  }
  func.func @transform_0(%arg0: i32) -> (i32, i32) {
    %c0_i32 = arith.constant 0 : i32
    %c0_i32_0 = arith.constant 0 : i32
    return %arg0, %c0_i32 : i32, i32
  }
  func.func @transform_1(%arg0: i32) -> (i32, i32) {
    %c0_i32 = arith.constant 0 : i32
    %c0_i32_0 = arith.constant 0 : i32
    return %arg0, %c0_i32 : i32, i32
  }
  func.func @transform_2(%arg0: i32) -> (i32, i32) {
    %c0_i32 = arith.constant 0 : i32
    %c0_i32_0 = arith.constant 0 : i32
    return %arg0, %c0_i32 : i32, i32
  }
  func.func @transform_3(%arg0: i32) -> (i32, i32) {
    %c0_i32 = arith.constant 0 : i32
    %c0_i32_0 = arith.constant 0 : i32
    return %arg0, %c0_i32 : i32, i32
  }
}

</mosaic_0001>

<llo_original>
// kernel: tpu_custom_call.1
$region0: #{tpu_custom_call.1}
  #allocation0 [shape = 'u32[]', space=smem, size = 0x4, offset = 0x4, fixed_abs, tag = 'smem constant byte address 0x4 - core index']
  #allocation1 [shape = 'u32[144,128]{1,0:T(1,128)}', space=vmem, size = 0x12000, scoped, tag = 'internal scratch']
  %s0 = inlined_call_operand.hbm [shape: f32[2,1024], index: 0, kind: input, shape index: {}]
  %s1 = inlined_call_operand.hbm [shape: f32[2,1024], index: 1, kind: input, shape index: {}]
  %s2 = inlined_call_operand.hbm [shape: f32[2,1024], index: 2, kind: output, shape index: {0}]
  %s3 = inlined_call_operand.hbm [shape: f32[2,1024], index: 3, kind: output, shape index: {1}]
  %4 = xla_tuple %s2, %s3
  %s5 = sld [smem:[#allocation0]]
  $region34: #{tpu_custom_call.1} parent=0
    _
  %s7 = ssub.s32 1, %s5
  %s8 = scalar_select 0, %s7, %s5
  $region1: #{tpu_custom_call.1} parent=0
    #allocation2 [shape = 'u8[8192]{0}', space=vmem, size = 0x2000, scoped, tag = 'input window, operand 0, single buffered']
    #allocation3 [shape = 's32[1]{0}', space=sflag, size = 0x4, scoped, tag = 'scoped memory for tpu_custom_call.1']
    #allocation4 [shape = 's32[1]{0}', space=sflag, size = 0x4, scoped, tag = 'scoped memory for tpu_custom_call.1']
    #allocation5 [shape = 'u8[8192]{0}', space=vmem, size = 0x2000, scoped, tag = 'input window, operand 1, single buffered']
    #allocation6 [shape = 's32[1]{0}', space=sflag, size = 0x4, scoped, tag = 'scoped memory for tpu_custom_call.1']
    #allocation7 [shape = 'u8[8192]{0}', space=vmem, size = 0x2000, scoped, tag = 'output window, operand 0, single buffered']
    #allocation8 [shape = 'u8[8192]{0}', space=vmem, size = 0x2000, scoped, tag = 'output window, operand 1, single buffered']
    #allocation9 [shape = 's32[1]{0}', space=sflag, size = 0x4, scoped, tag = 'scoped memory for tpu_custom_call.1']
    %9 = vsyncpa [#allocation3], 0
    %10 = vsyncpa [#allocation6], 0
    %11 = vsyncpa [#allocation4], 0
    %12 = vsyncpa [#allocation9], 0
    // Predicated region
    $region2: #{tpu_custom_call.1} parent=1 // pred_check
      _
    $region3: #{tpu_custom_call.1} parent=1 // pred_check_branch
      %14 = sbr.rel (0) target = $region5
    $region4: #{tpu_custom_call.1} parent=1 // pred_region
      %s16 = ssub.s32 256, 256
      %17 = vsyncadd [#allocation3], %s16
      %s19 = sshll.u32 [#allocation2], 4
      %s20 = int_to_ptr.vmem [resolvable:$true] %s19
      %22 = dma.hbm_to_vmem [thread:$0]  %s0, 256, %s20, [#allocation3]
    $region5: #{tpu_custom_call.1} parent=1 // pred_fallthru
      _
    // Predicated region
    $region6: #{tpu_custom_call.1} parent=1 // pred_check
      _
    $region7: #{tpu_custom_call.1} parent=1 // pred_check_branch
      %24 = sbr.rel (0) target = $region9
    $region8: #{tpu_custom_call.1} parent=1 // pred_region
      %s26 = ssub.s32 256, 256
      %27 = vsyncadd [#allocation6], %s26
      %s29 = sshll.u32 [#allocation5], 4
      %s30 = int_to_ptr.vmem [resolvable:$true] %s29
      %32 = dma.hbm_to_vmem [thread:$0]  %s1, 256, %s30, [#allocation6]
    $region9: #{tpu_custom_call.1} parent=1 // pred_fallthru
      _
    // Predicated region
    $region10: #{tpu_custom_call.1} parent=1 // pred_check
      _
    $region11: #{tpu_custom_call.1} parent=1 // pred_check_branch
      %34 = sbr.rel (0) target = $region13
    $region12: #{tpu_custom_call.1} parent=1 // pred_region
      %35 = dma.done [#allocation3], 256
    $region13: #{tpu_custom_call.1} parent=1 // pred_fallthru
      _
    // Predicated region
    $region14: #{tpu_custom_call.1} parent=1 // pred_check
      _
    $region15: #{tpu_custom_call.1} parent=1 // pred_check_branch
      %37 = sbr.rel (0) target = $region17
    $region16: #{tpu_custom_call.1} parent=1 // pred_region
      %38 = dma.done [#allocation6], 256
    $region17: #{tpu_custom_call.1} parent=1 // pred_fallthru
      _
    %v39 = vld [vmem:[#allocation2] sm:$0xff]
    %v40 = vld [vmem:[#allocation2 + $0x8] sm:$0xff]
    %v41 = vld [vmem:[#allocation5] sm:$0xff]
    %v42 = vld [vmem:[#allocation5 + $0x8] sm:$0xff]
    %v43 = vmul.f32 %v39, %v39
    %v44 = vmul.f32 %v40, %v40
    %v45 = vmul.f32 %v41, %v41
    %v46 = vmul.f32 %v42, %v42
    %v47 = vadd.f32 %v43, %v45
    %v48 = vadd.f32 %v44, %v46
    %v49 = vrsqrt.pop %v47
    %v50 = vrsqrt.pop %v48
    %vm51 = vcmp.gt.f32.partialorder %v47, 0.0
    %vm52 = vcmp.gt.f32.partialorder %v48, 0.0
    %v53 = vmul.f32 %v39, %v49
    %v54 = vmul.f32 %v40, %v50
    %v55 = vsel %vm51, %v53, 1.0
    %v56 = vsel %vm52, %v54, 1.0
    %v57 = vmul.f32 %v55, 0.5
    %v58 = vmul.f32 %v56, 0.5
    %v59 = vadd.f32 %v57, 0.5
    %v60 = vadd.f32 %v58, 0.5
    %v61 = vmul.f32 %v59, %v39
    %v62 = vmul.f32 %v60, %v40
    %63 = vst [vmem:[#allocation7] sm:$0xff] %v61
    %64 = vst [vmem:[#allocation7 + $0x8] sm:$0xff] %v62
    %v65 = vmul.f32 %v59, %v41
    %v66 = vmul.f32 %v60, %v42
    %67 = vst [vmem:[#allocation8] sm:$0xff] %v65
    %68 = vst [vmem:[#allocation8 + $0x8] sm:$0xff] %v66
    // Predicated region
    $region18: #{tpu_custom_call.1} parent=1 // pred_check
      _
    $region19: #{tpu_custom_call.1} parent=1 // pred_check_branch
      %70 = sbr.rel (0) target = $region21
    $region20: #{tpu_custom_call.1} parent=1 // pred_region
      %s72 = ssub.s32 256, 256
      %73 = vsyncadd [#allocation4], %s72
      %s75 = sshll.u32 [#allocation7], 4
      %s76 = int_to_ptr.vmem [resolvable:$true] %s75
      %78 = dma.vmem_to_hbm [thread:$0]  %s76, 256, %s2, [#allocation4]
    $region21: #{tpu_custom_call.1} parent=1 // pred_fallthru
      _
    // Predicated region
    $region22: #{tpu_custom_call.1} parent=1 // pred_check
      _
    $region23: #{tpu_custom_call.1} parent=1 // pred_check_branch
      %80 = sbr.rel (0) target = $region25
    $region24: #{tpu_custom_call.1} parent=1 // pred_region
      %s82 = ssub.s32 256, 256
      %83 = vsyncadd [#allocation9], %s82
      %s85 = sshll.u32 [#allocation8], 4
      %s86 = int_to_ptr.vmem [resolvable:$true] %s85
      %88 = dma.vmem_to_hbm [thread:$0]  %s86, 256, %s3, [#allocation9]
    $region25: #{tpu_custom_call.1} parent=1 // pred_fallthru
      _
    // Predicated region
    $region26: #{tpu_custom_call.1} parent=1 // pred_check
      _
    $region27: #{tpu_custom_call.1} parent=1 // pred_check_branch
      %90 = sbr.rel (0) target = $region29
    $region28: #{tpu_custom_call.1} parent=1 // pred_region
      %91 = dma.done [#allocation4], 256
    $region29: #{tpu_custom_call.1} parent=1 // pred_fallthru
      _
    // Predicated region
    $region30: #{tpu_custom_call.1} parent=1 // pred_check
      _
    $region31: #{tpu_custom_call.1} parent=1 // pred_check_branch
      %93 = sbr.rel (0) target = $region33
    $region32: #{tpu_custom_call.1} parent=1 // pred_region
      %94 = dma.done [#allocation9], 256
    $region33: #{tpu_custom_call.1} parent=1 // pred_fallthru
      _
    %95 = vsyncpa [#allocation3], 1
    %96 = vsyncpa [#allocation6], 1
    %97 = vsyncpa [#allocation4], 1
    %98 = vsyncpa [#allocation9], 1

</llo_original>
